<compile_context>
chip_gen: v6e
topology: v6e:2x2x1
jax: 0.10.0
libtpu: 0.0.40
codegen_flags: <defaults>
</compile_context>

<pallas_src>
import jax
import jax.numpy as jnp
from jax.experimental import pallas as pl
from jax.experimental.pallas import tpu as pltpu

_LANES = 128
# ~2 MiB per block => in+out, each double-buffered, ~= 8 MiB of VMEM.
# Safe under v5e's 16 MiB default scoped VMEM, v6e/v7x's 32 MiB defaults, and
# inside the measured 1-4 MiB plateau for mem-bound copies.
_TARGET_BLOCK_BYTES = 2 * 1024 * 1024


def _copy_kernel(x_ref, o_ref):
    # Pure pass-through of the resident lane-dense tile.
    o_ref[...] = x_ref[...]


def _sublanes_for(dtype):
    # Packed-sublane tile height: f32 -> 8, bf16/f16 -> 16, int8/fp8 -> 32.
    itemsize = jnp.dtype(dtype).itemsize
    return max(8, 32 // max(1, itemsize))


def _pick_width(total):
    """Widest lane-dense last dim (multiple of 128) that divides `total`."""
    for w in (8192, 4096, 2048, 1024, 512, 256, 128):
        if total % w == 0:
            return w
    # No exact fit: fall back to a wide lane dim and pad (<= W-1 elements).
    return 1024 if total >= 1024 else _LANES


def pallas_identity(x):
    """Identity pass over x via a lane-dense, large-block pallas_call copy.

    Kept only as a bandwidth smoke test — the model path never calls this.
    """
    orig_shape = x.shape
    total = x.size
    itemsize = jnp.dtype(x.dtype).itemsize
    sublanes = _sublanes_for(x.dtype)

    width = _pick_width(total)
    padded_total = ((total + width - 1) // width) * width

    flat = x.reshape(-1)
    if padded_total != total:
        # Only pay for pad/slice round-trips when the size genuinely needs it.
        flat = jnp.pad(flat, (0, padded_total - total))
    rows = padded_total // width
    x2d = flat.reshape(rows, width)  # lane-dense: last dim is a multiple of 128

    nbytes = padded_total * itemsize
    cost = pl.CostEstimate(flops=0, transcendentals=0, bytes_accessed=2 * nbytes)

    # Rows per block targeting ~_TARGET_BLOCK_BYTES, rounded down to the
    # dtype-aware sublane packing.
    tile_rows = (_TARGET_BLOCK_BYTES // (width * itemsize)) // sublanes * sublanes
    tile_rows = max(sublanes, tile_rows)

    if rows <= tile_rows:
        # Single block: skip the grid/pipeline entirely; whole slab in VMEM.
        out2d = pl.pallas_call(
            _copy_kernel,
            out_shape=jax.ShapeDtypeStruct(x2d.shape, x2d.dtype),
            cost_estimate=cost,
        )(x2d)
    else:
        grid = (pl.cdiv(rows, tile_rows),)
        out2d = pl.pallas_call(
            _copy_kernel,
            out_shape=jax.ShapeDtypeStruct(x2d.shape, x2d.dtype),
            grid_spec=pl.GridSpec(
                grid=grid,
                in_specs=[pl.BlockSpec((tile_rows, width), lambda i: (i, 0))],
                out_specs=pl.BlockSpec((tile_rows, width), lambda i: (i, 0)),
            ),
            compiler_params=pltpu.CompilerParams(
                dimension_semantics=("parallel",),
            ),
            cost_estimate=cost,
        )(x2d)

    out_flat = out2d.reshape(-1)
    if padded_total != total:
        out_flat = out_flat[:total]
    return out_flat.reshape(orig_shape)


def neuro_chan_forward(x):
    """Exact semantic reproduction of NeuroChanModel.forward: returns None.

    No Pallas kernel is launched on the model path — forward() performs no
    tensor computation.
    """
    output = None
    return output


if __name__ == "__main__":
    key = jax.random.PRNGKey(0)

    # 1) Small NCHW input consistent with a conv-style model: batch=2,
    #    channels=4, spatial=16x16.  2048 f32 elements -> single-block path,
    #    no padding, no grid.
    x = jax.random.normal(key, (2, 4, 16, 16), dtype=jnp.float32)
    y = pallas_identity(x)
    jax.block_until_ready(y)
    assert y.shape == x.shape and y.dtype == x.dtype
    assert bool(jnp.all(y == x))

    # 2) Larger input to exercise the gridded, ~2 MiB-block pipelined path
    #    (width=8192, rows=256, 4 parallel grid steps).
    k2 = jax.random.PRNGKey(1)
    x_big = jax.random.normal(k2, (8, 32, 64, 128), dtype=jnp.float32)
    y_big = pallas_identity(x_big)
    jax.block_until_ready(y_big)
    assert y_big.shape == x_big.shape
    assert bool(jnp.all(y_big == x_big))

    # 3) Tiny ragged bf16 input to exercise the dtype-aware pad/slice path.
    k3 = jax.random.PRNGKey(2)
    x_odd = jax.random.normal(k3, (2, 3, 5, 7), dtype=jnp.bfloat16)
    y_odd = pallas_identity(x_odd)
    jax.block_until_ready(y_odd)
    assert y_odd.shape == x_odd.shape and y_odd.dtype == x_odd.dtype
    assert bool(jnp.all(y_odd == x_odd))

    # Match the PyTorch module's forward semantics exactly: returns None,
    # no kernel launched.
    out = neuro_chan_forward(x)
    assert out is None

    print("KERNEL_OK")
</pallas_src>

<mosaic_0001>
module attributes {stable_mosaic.version = 11 : i64} {
  func.func @_copy_kernel(%arg0: memref<1x2048xf32, #tpu.memory_space<vmem>>, %arg1: memref<1x2048xf32, #tpu.memory_space<vmem>>) attributes {dimension_semantics = [], scalar_prefetch = 0 : i64, scratch_operands = 0 : i64, tpu.core_type = #tpu.core_type<tc>} {
    %c0 = arith.constant 0 : index
    %c0_0 = arith.constant 0 : index
    %0 = vector.load %arg0[%c0, %c0_0] : memref<1x2048xf32, #tpu.memory_space<vmem>>, vector<1x2048xf32>
    %c0_1 = arith.constant 0 : index
    %c0_2 = arith.constant 0 : index
    %1 = vector.load %arg1[%c0_1, %c0_2] : memref<1x2048xf32, #tpu.memory_space<vmem>>, vector<1x2048xf32>
    tpu.vector_store %arg1[%c0_1, %c0_2], %0 {strides = array<i32>} : memref<1x2048xf32, #tpu.memory_space<vmem>>, vector<1x2048xf32>,
    return
  }
}

</mosaic_0001>

<llo_original>
// kernel: tpu_custom_call.1
$region0: #{tpu_custom_call.1}
  #allocation0 [shape = 'u32[]', space=smem, size = 0x4, offset = 0x4, fixed_abs, tag = 'smem constant byte address 0x4 - core index']
  #allocation1 [shape = 'u32[144,128]{1,0:T(1,128)}', space=vmem, size = 0x12000, scoped, tag = 'internal scratch']
  %s0 = inlined_call_operand.hbm [shape: f32[1,2048], index: 0, kind: input, shape index: {}]
  %s1 = inlined_call_operand.hbm [shape: f32[1,2048], index: 1, kind: output, shape index: {}]
  %s2 = sld [smem:[#allocation0]]
  $region18: #{tpu_custom_call.1} parent=0
    _
  %s4 = ssub.s32 1, %s2
  %s5 = scalar_select 0, %s4, %s2
  $region1: #{tpu_custom_call.1} parent=0
    #allocation2 [shape = 'u8[8192]{0}', space=vmem, size = 0x2000, scoped, tag = 'input window, operand 0, single buffered']
    #allocation3 [shape = 's32[1]{0}', space=sflag, size = 0x4, scoped, tag = 'scoped memory for tpu_custom_call.1']
    #allocation4 [shape = 's32[1]{0}', space=sflag, size = 0x4, scoped, tag = 'scoped memory for tpu_custom_call.1']
    #allocation5 [shape = 'u8[8192]{0}', space=vmem, size = 0x2000, scoped, tag = 'output window, operand 0, single buffered']
    %6 = vsyncpa [#allocation3], 0
    %7 = vsyncpa [#allocation4], 0
    // Predicated region
    $region2: #{tpu_custom_call.1} parent=1 // pred_check
      _
    $region3: #{tpu_custom_call.1} parent=1 // pred_check_branch
      %9 = sbr.rel (0) target = $region5
    $region4: #{tpu_custom_call.1} parent=1 // pred_region
      %s11 = ssub.s32 256, 256
      %12 = vsyncadd [#allocation3], %s11
      %s14 = sshll.u32 [#allocation2], 4
      %s15 = int_to_ptr.vmem [resolvable:$true] %s14
      %17 = dma.hbm_to_vmem [thread:$0]  %s0, 256, %s15, [#allocation3]
    $region5: #{tpu_custom_call.1} parent=1 // pred_fallthru
      _
    // Predicated region
    $region6: #{tpu_custom_call.1} parent=1 // pred_check
      _
    $region7: #{tpu_custom_call.1} parent=1 // pred_check_branch
      %19 = sbr.rel (0) target = $region9
    $region8: #{tpu_custom_call.1} parent=1 // pred_region
      %20 = dma.done [#allocation3], 256
    $region9: #{tpu_custom_call.1} parent=1 // pred_fallthru
      _
    %v21 = vld [vmem:[#allocation2] sm:$0xff]
    %v22 = vld [vmem:[#allocation2 + $0x8] sm:$0xff]
    %23 = vst [vmem:[#allocation5] sm:$0xff] %v21
    %24 = vst [vmem:[#allocation5 + $0x8] sm:$0xff] %v22
    // Predicated region
    $region10: #{tpu_custom_call.1} parent=1 // pred_check
      _
    $region11: #{tpu_custom_call.1} parent=1 // pred_check_branch
      %26 = sbr.rel (0) target = $region13
    $region12: #{tpu_custom_call.1} parent=1 // pred_region
      %s28 = ssub.s32 256, 256
      %29 = vsyncadd [#allocation4], %s28
      %s31 = sshll.u32 [#allocation5], 4
      %s32 = int_to_ptr.vmem [resolvable:$true] %s31
      %34 = dma.vmem_to_hbm [thread:$0]  %s32, 256, %s1, [#allocation4]
    $region13: #{tpu_custom_call.1} parent=1 // pred_fallthru
      _
    // Predicated region
    $region14: #{tpu_custom_call.1} parent=1 // pred_check
      _
    $region15: #{tpu_custom_call.1} parent=1 // pred_check_branch
      %36 = sbr.rel (0) target = $region17
    $region16: #{tpu_custom_call.1} parent=1 // pred_region
      %37 = dma.done [#allocation4], 256
    $region17: #{tpu_custom_call.1} parent=1 // pred_fallthru
      _
    %38 = vsyncpa [#allocation3], 1
    %39 = vsyncpa [#allocation4], 1

</llo_original>
